<compile_context>
chip_gen: v7x
topology: tpu7x:2x2x1
jax: 0.10.0
libtpu: 0.0.40
codegen_flags: <defaults>
</compile_context>

<pallas_src>
import numpy as np
import jax
import jax.numpy as jnp
from jax.experimental import pallas as pl
from jax.experimental.pallas import tpu as pltpu

LANE = 128
SUBLANE = 8


def _round_up(x, m):
    return (x + m - 1) // m * m


# ----------------------------- Pallas kernel ------------------------------ #
def wav_encoder_kernel(x_ref, wt_ref, b_ref, o_ref):
    # x_ref: [tm, K]; wt_ref: [K, Np] (pre-transposed + lane-padded);
    # b_ref: [1, Np]; o_ref: [tm, Np]
    y = jnp.dot(x_ref[...], wt_ref[...], preferred_element_type=jnp.float32)
    o_ref[...] = (y + b_ref[...]).astype(o_ref.dtype)


# --------------------------- parameter preparation ------------------------- #
def prepare_params(w, b, lane=LANE):
    """One-time prep (do this at init, NOT per forward call).

    w: PyTorch nn.Linear weight [out, in]; b: [out].
    Returns (wt, bp): transposed, lane-padded weight [in, Np] and bias [1, Np]."""
    out_dim, in_dim = w.shape
    n_pad = _round_up(out_dim, lane)
    wt = jnp.zeros((in_dim, n_pad), w.dtype).at[:, :out_dim].set(w.T)
    bp = jnp.zeros((1, n_pad), b.dtype).at[:, :out_dim].set(b)
    return wt, bp


# ------------------------------ pallas wrapper ----------------------------- #
def wav_encoder_pallas(x2d, wt, bp):
    """x2d: [M, K] f32; wt: [K, Np]; bp: [1, Np]  ->  [M, Np] (lane-padded)."""
    M, K = x2d.shape
    Kw, Np = wt.shape
    assert K == Kw and Np % LANE == 0

    # Row tiling: one block for small M, 128-row tiles (parallel axis; megacore
    # on v7x) for large M.  Pad rows to a multiple of the tile size.
    mp = _round_up(M, SUBLANE)
    tm = mp if mp <= 128 else 128
    mp = _round_up(mp, tm)
    if mp != M:
        x2d = jnp.pad(x2d, ((0, mp - M), (0, 0)))

    out = pl.pallas_call(
        wav_encoder_kernel,
        out_shape=jax.ShapeDtypeStruct((mp, Np), x2d.dtype),
        grid_spec=pltpu.PrefetchScalarGridSpec(
            num_scalar_prefetch=0,
            grid=(mp // tm,),
            in_specs=[
                pl.BlockSpec((tm, K), lambda i: (i, 0)),
                pl.BlockSpec((K, Np), lambda i: (0, 0)),  # weights stay resident
                pl.BlockSpec((1, Np), lambda i: (0, 0)),  # bias stays resident
            ],
            out_specs=pl.BlockSpec((tm, Np), lambda i: (i, 0)),
        ),
        compiler_params=pltpu.CompilerParams(
            dimension_semantics=("parallel",)),
    )(x2d, wt, bp)
    return out[:M]


def wav_encoder_forward(rep, wt, bp, out_dim):
    """rep: [..., 1024] -> [..., out_dim]  (== nn.Linear(1024, 64)(rep))."""
    lead = rep.shape[:-1]
    K = rep.shape[-1]
    x2d = rep.reshape(-1, K)
    y = wav_encoder_pallas(x2d, wt, bp)           # [M, Np] lane-padded
    return y[:, :out_dim].reshape(*lead, out_dim)


# ------------------------------- reference --------------------------------- #
def reference_forward(rep, w, b):
    return jnp.dot(rep, w.T) + b


if __name__ == "__main__":
    in_dim, out_dim = 1024, 64
    batch, seq = 2, 8

    key = jax.random.PRNGKey(0)
    k1, k2, k3 = jax.random.split(key, 3)

    # Deterministic synthetic parameters (PyTorch nn.Linear layout: [out, in]).
    scale = 1.0 / np.sqrt(in_dim)
    w = jax.random.uniform(k1, (out_dim, in_dim), jnp.float32, -scale, scale)
    b = jax.random.uniform(k2, (out_dim,), jnp.float32, -scale, scale)
    rep = jax.random.normal(k3, (batch, seq, in_dim), dtype=jnp.float32)

    # One-time parameter prep (transpose + lane padding) outside the hot path.
    wt, bp = prepare_params(w, b)

    out = wav_encoder_forward(rep, wt, bp, out_dim)
    out = jax.block_until_ready(out)

    ref = reference_forward(rep, w, b)
    assert out.shape == (batch, seq, out_dim), out.shape
    np.testing.assert_allclose(np.asarray(out), np.asarray(ref),
                               rtol=1e-4, atol=1e-4)

    print("KERNEL_OK")
</pallas_src>

<mosaic_0001>
module attributes {stable_mosaic.version = 11 : i64} {
  func.func @wav_encoder_kernel(%arg0: i32, %arg1: memref<16x1024xf32, #tpu.memory_space<vmem>>, %arg2: memref<1024x128xf32, #tpu.memory_space<vmem>>, %arg3: memref<1x128xf32, #tpu.memory_space<vmem>>, %arg4: memref<16x128xf32, #tpu.memory_space<vmem>>) attributes {dimension_semantics = [#tpu.dimension_semantics<parallel>], iteration_bounds = array<i64: 1>, scalar_prefetch = 0 : i64, scratch_operands = 0 : i64, tpu.core_type = #tpu.core_type<tc>, window_params = [{transform_indices = @transform_0, window_bounds = array<i64: 16, 1024>}, {pipeline_mode = #tpu.pipeline_mode<synchronous>, transform_indices = @transform_1, window_bounds = array<i64: 1024, 128>}, {pipeline_mode = #tpu.pipeline_mode<synchronous>, transform_indices = @transform_2, window_bounds = array<i64: 1, 128>}, {transform_indices = @transform_3, window_bounds = array<i64: 16, 128>}]} {
    %c0 = arith.constant 0 : index
    %c0_0 = arith.constant 0 : index
    %0 = vector.load %arg1[%c0, %c0_0] : memref<16x1024xf32, #tpu.memory_space<vmem>>, vector<16x1024xf32>
    %c0_1 = arith.constant 0 : index
    %c0_2 = arith.constant 0 : index
    %1 = vector.load %arg2[%c0_1, %c0_2] : memref<1024x128xf32, #tpu.memory_space<vmem>>, vector<1024x128xf32>
    %cst = arith.constant dense<0.000000e+00> : vector<16x128xf32>
    %2 = tpu.matmul %0, %1, %cst {dimension_numbers = #tpu.dot_dimension_numbers<[1], [0], [0], [1], [0, 0, 1, 1], [], []>} : vector<16x1024xf32>, vector<1024x128xf32>, vector<16x128xf32> -> vector<16x128xf32>
    %c0_3 = arith.constant 0 : index
    %c0_4 = arith.constant 0 : index
    %3 = vector.load %arg3[%c0_3, %c0_4] : memref<1x128xf32, #tpu.memory_space<vmem>>, vector<1x128xf32>
    %4 = vector.broadcast %3 : vector<1x128xf32> to vector<16x128xf32>
    %5 = arith.addf %2, %4 : vector<16x128xf32>
    %c0_5 = arith.constant 0 : index
    %c0_6 = arith.constant 0 : index
    %6 = vector.load %arg4[%c0_5, %c0_6] : memref<16x128xf32, #tpu.memory_space<vmem>>, vector<16x128xf32>
    tpu.vector_store %arg4[%c0_5, %c0_6], %5 {strides = array<i32>} : memref<16x128xf32, #tpu.memory_space<vmem>>, vector<16x128xf32>,
    return
  }
  func.func @transform_0(%arg0: i32) -> (i32, i32) {
    %c0_i32 = arith.constant 0 : i32
    %c0_i32_0 = arith.constant 0 : i32
    return %arg0, %c0_i32 : i32, i32
  }
  func.func @transform_1(%arg0: i32) -> (i32, i32) {
    %c0_i32 = arith.constant 0 : i32
    %c0_i32_0 = arith.constant 0 : i32
    %c0_i32_1 = arith.constant 0 : i32
    return %c0_i32, %c0_i32_0 : i32, i32
  }
  func.func @transform_2(%arg0: i32) -> (i32, i32) {
    %c0_i32 = arith.constant 0 : i32
    %c0_i32_0 = arith.constant 0 : i32
    %c0_i32_1 = arith.constant 0 : i32
    return %c0_i32, %c0_i32_0 : i32, i32
  }
  func.func @transform_3(%arg0: i32) -> (i32, i32) {
    %c0_i32 = arith.constant 0 : i32
    %c0_i32_0 = arith.constant 0 : i32
    return %arg0, %c0_i32 : i32, i32
  }
}

</mosaic_0001>

<llo_original>
// kernel: tpu_custom_call.1
$region0: #{tpu_custom_call.1}
  #allocation0 [shape = 'u32[]', space=smem, size = 0x4, offset = 0x4, fixed_abs, tag = 'smem constant byte address 0x4 - core index']
  #allocation1 [shape = 'u32[144,128]{1,0:T(1,128)}', space=vmem, size = 0x12000, scoped, tag = 'internal scratch']
  %s0 = inlined_call_operand.hbm [shape: f32[16,1024], index: 0, kind: input, shape index: {}]
  %s1 = inlined_call_operand.hbm [shape: f32[1024,128], index: 1, kind: input, shape index: {}]
  %s2 = inlined_call_operand.vmem [shape: f32[1,128], index: 2, kind: input, shape index: {}]
  %s3 = inlined_call_operand.hbm [shape: f32[16,128], index: 3, kind: output, shape index: {}]
  %s4 = sld [smem:[#allocation0]]
  $region30: #{tpu_custom_call.1} parent=0
    _
  %s6 = ssub.s32 1, %s4
  %s7 = scalar_select 0, %s6, %s4
  $region1: #{tpu_custom_call.1} parent=0
    #allocation2 [shape = 'u8[65536]{0}', space=vmem, size = 0x10000, scoped, tag = 'input window, operand 0, single buffered']
    #allocation3 [shape = 's32[1]{0}', space=sflag, size = 0x4, scoped, tag = 'scoped memory for tpu_custom_call.1']
    #allocation4 [shape = 's32[1]{0}', space=sflag, size = 0x4, scoped, tag = 'scoped memory for tpu_custom_call.1']
    #allocation5 [shape = 'u8[524288]{0}', space=vmem, size = 0x80000, scoped, tag = 'input window, operand 1, single buffered']
    #allocation6 [shape = 's32[1]{0}', space=sflag, size = 0x4, scoped, tag = 'scoped memory for tpu_custom_call.1']
    #allocation7 [shape = 'u8[8192]{0}', space=vmem, size = 0x2000, scoped, tag = 'output window, operand 0, single buffered']
    %8 = vsyncpa [#allocation3], 0
    %9 = vsyncpa [#allocation6], 0
    %10 = vsyncpa [#allocation4], 0
    // Predicated region
    $region2: #{tpu_custom_call.1} parent=1 // pred_check
      _
    $region3: #{tpu_custom_call.1} parent=1 // pred_check_branch
      %12 = sbr.rel (0) target = $region5
    $region4: #{tpu_custom_call.1} parent=1 // pred_region
      %s14 = ssub.s32 2048, 2048
      %15 = vsyncadd [#allocation3], %s14
      %s16 = sshll.u32 [#allocation2], 4
      %s17 = int_to_ptr.vmem [resolvable:$true] %s16
      %22 = dma.hbm_to_vmem [thread:$0]  %s0, 2048, %s17, [#allocation3], 1024, 1024, 64
    $region5: #{tpu_custom_call.1} parent=1 // pred_fallthru
      _
    // Predicated region
    $region6: #{tpu_custom_call.1} parent=1 // pred_check
      _
    $region7: #{tpu_custom_call.1} parent=1 // pred_check_branch
      %24 = sbr.rel (0) target = $region9
    $region8: #{tpu_custom_call.1} parent=1 // pred_region
      %s26 = ssub.s32 16384, 16384
      %27 = vsyncadd [#allocation6], %s26
      %s28 = sshll.u32 [#allocation5], 4
      %s29 = int_to_ptr.vmem [resolvable:$true] %s28
      %34 = dma.hbm_to_vmem [thread:$0]  %s1, 16384, %s29, [#allocation6], 128, 128, 8
    $region9: #{tpu_custom_call.1} parent=1 // pred_fallthru
      _
    // Predicated region
    $region10: #{tpu_custom_call.1} parent=1 // pred_check
      _
    $region11: #{tpu_custom_call.1} parent=1 // pred_check_branch
      %36 = sbr.rel (0) target = $region13
    $region12: #{tpu_custom_call.1} parent=1 // pred_region
      _
    $region13: #{tpu_custom_call.1} parent=1 // pred_fallthru
      _
    // Predicated region
    $region14: #{tpu_custom_call.1} parent=1 // pred_check
      _
    $region15: #{tpu_custom_call.1} parent=1 // pred_check_branch
      %38 = sbr.rel (0) target = $region17
    $region16: #{tpu_custom_call.1} parent=1 // pred_region
      %39 = dma.done [#allocation3], 2048
    $region17: #{tpu_custom_call.1} parent=1 // pred_fallthru
      _
    // Predicated region
    $region18: #{tpu_custom_call.1} parent=1 // pred_check
      _
    $region19: #{tpu_custom_call.1} parent=1 // pred_check_branch
      %41 = sbr.rel (0) target = $region21
    $region20: #{tpu_custom_call.1} parent=1 // pred_region
      %42 = dma.done [#allocation6], 16384
    $region21: #{tpu_custom_call.1} parent=1 // pred_fallthru
      _
    %v43 = vld [vmem:[#allocation2] sm:$0xff]
    %v44 = vld [vmem:[#allocation2 + $0x8] sm:$0xff]
    %v45 = vld [vmem:[#allocation2 + $0x10] sm:$0xff]
    %v46 = vld [vmem:[#allocation2 + $0x18] sm:$0xff]
    %v47 = vld [vmem:[#allocation2 + $0x20] sm:$0xff]
    %v48 = vld [vmem:[#allocation2 + $0x28] sm:$0xff]
    %v49 = vld [vmem:[#allocation2 + $0x30] sm:$0xff]
    %v50 = vld [vmem:[#allocation2 + $0x38] sm:$0xff]
    %v51 = vld [vmem:[#allocation2 + $0x40] sm:$0xff]
    %v52 = vld [vmem:[#allocation2 + $0x48] sm:$0xff]
    %v53 = vld [vmem:[#allocation2 + $0x50] sm:$0xff]
    %v54 = vld [vmem:[#allocation2 + $0x58] sm:$0xff]
    %v55 = vld [vmem:[#allocation2 + $0x60] sm:$0xff]
    %v56 = vld [vmem:[#allocation2 + $0x68] sm:$0xff]
    %v57 = vld [vmem:[#allocation2 + $0x70] sm:$0xff]
    %v58 = vld [vmem:[#allocation2 + $0x78] sm:$0xff]
    %v59 = vld [vmem:[#allocation5] sm:$0xff]
    %v60 = vld [vmem:[#allocation5 + $0x8] sm:$0xff]
    %v61 = vld [vmem:[#allocation5 + $0x10] sm:$0xff]
    %v62 = vld [vmem:[#allocation5 + $0x18] sm:$0xff]
    %v63 = vld [vmem:[#allocation5 + $0x20] sm:$0xff]
    %v64 = vld [vmem:[#allocation5 + $0x28] sm:$0xff]
    %v65 = vld [vmem:[#allocation5 + $0x30] sm:$0xff]
    %v66 = vld [vmem:[#allocation5 + $0x38] sm:$0xff]
    %v67 = vld [vmem:[#allocation5 + $0x40] sm:$0xff]
    %v68 = vld [vmem:[#allocation5 + $0x48] sm:$0xff]
    %v69 = vld [vmem:[#allocation5 + $0x50] sm:$0xff]
    %v70 = vld [vmem:[#allocation5 + $0x58] sm:$0xff]
    %v71 = vld [vmem:[#allocation5 + $0x60] sm:$0xff]
    %v72 = vld [vmem:[#allocation5 + $0x68] sm:$0xff]
    %v73 = vld [vmem:[#allocation5 + $0x70] sm:$0xff]
    %v74 = vld [vmem:[#allocation5 + $0x78] sm:$0xff]
    %v75 = vld [vmem:[#allocation5 + $0x80] sm:$0xff]
    %v76 = vld [vmem:[#allocation5 + $0x88] sm:$0xff]
    %v77 = vld [vmem:[#allocation5 + $0x90] sm:$0xff]
    %v78 = vld [vmem:[#allocation5 + $0x98] sm:$0xff]
    %v79 = vld [vmem:[#allocation5 + $0xa0] sm:$0xff]
    %v80 = vld [vmem:[#allocation5 + $0xa8] sm:$0xff]
    %v81 = vld [vmem:[#allocation5 + $0xb0] sm:$0xff]
    %v82 = vld [vmem:[#allocation5 + $0xb8] sm:$0xff]
    %v83 = vld [vmem:[#allocation5 + $0xc0] sm:$0xff]
    %v84 = vld [vmem:[#allocation5 + $0xc8] sm:$0xff]
    %v85 = vld [vmem:[#allocation5 + $0xd0] sm:$0xff]
    %v86 = vld [vmem:[#allocation5 + $0xd8] sm:$0xff]
    %v87 = vld [vmem:[#allocation5 + $0xe0] sm:$0xff]
    %v88 = vld [vmem:[#allocation5 + $0xe8] sm:$0xff]
    %v89 = vld [vmem:[#allocation5 + $0xf0] sm:$0xff]
    %v90 = vld [vmem:[#allocation5 + $0xf8] sm:$0xff]
    %v91 = vld [vmem:[#allocation5 + $0x100] sm:$0xff]
    %v92 = vld [vmem:[#allocation5 + $0x108] sm:$0xff]
    %v93 = vld [vmem:[#allocation5 + $0x110] sm:$0xff]
    %v94 = vld [vmem:[#allocation5 + $0x118] sm:$0xff]
    %v95 = vld [vmem:[#allocation5 + $0x120] sm:$0xff]
    %v96 = vld [vmem:[#allocation5 + $0x128] sm:$0xff]
    %v97 = vld [vmem:[#allocation5 + $0x130] sm:$0xff]
    %v98 = vld [vmem:[#allocation5 + $0x138] sm:$0xff]
    %v99 = vld [vmem:[#allocation5 + $0x140] sm:$0xff]
    %v100 = vld [vmem:[#allocation5 + $0x148] sm:$0xff]
    %v101 = vld [vmem:[#allocation5 + $0x150] sm:$0xff]
    %v102 = vld [vmem:[#allocation5 + $0x158] sm:$0xff]
    %v103 = vld [vmem:[#allocation5 + $0x160] sm:$0xff]
    %v104 = vld [vmem:[#allocation5 + $0x168] sm:$0xff]
    %v105 = vld [vmem:[#allocation5 + $0x170] sm:$0xff]
    %v106 = vld [vmem:[#allocation5 + $0x178] sm:$0xff]
    %v107 = vld [vmem:[#allocation5 + $0x180] sm:$0xff]
    %v108 = vld [vmem:[#allocation5 + $0x188] sm:$0xff]
    %v109 = vld [vmem:[#allocation5 + $0x190] sm:$0xff]
    %v110 = vld [vmem:[#allocation5 + $0x198] sm:$0xff]
    %v111 = vld [vmem:[#allocation5 + $0x1a0] sm:$0xff]
    %v112 = vld [vmem:[#allocation5 + $0x1a8] sm:$0xff]
    %v113 = vld [vmem:[#allocation5 + $0x1b0] sm:$0xff]
    %v114 = vld [vmem:[#allocation5 + $0x1b8] sm:$0xff]
    %v115 = vld [vmem:[#allocation5 + $0x1c0] sm:$0xff]
    %v116 = vld [vmem:[#allocation5 + $0x1c8] sm:$0xff]
    %v117 = vld [vmem:[#allocation5 + $0x1d0] sm:$0xff]
    %v118 = vld [vmem:[#allocation5 + $0x1d8] sm:$0xff]
    %v119 = vld [vmem:[#allocation5 + $0x1e0] sm:$0xff]
    %v120 = vld [vmem:[#allocation5 + $0x1e8] sm:$0xff]
    %v121 = vld [vmem:[#allocation5 + $0x1f0] sm:$0xff]
    %v122 = vld [vmem:[#allocation5 + $0x1f8] sm:$0xff]
    %v123 = vld [vmem:[#allocation5 + $0x200] sm:$0xff]
    %v124 = vld [vmem:[#allocation5 + $0x208] sm:$0xff]
    %v125 = vld [vmem:[#allocation5 + $0x210] sm:$0xff]
    %v126 = vld [vmem:[#allocation5 + $0x218] sm:$0xff]
    %v127 = vld [vmem:[#allocation5 + $0x220] sm:$0xff]
    %v128 = vld [vmem:[#allocation5 + $0x228] sm:$0xff]
    %v129 = vld [vmem:[#allocation5 + $0x230] sm:$0xff]
    %v130 = vld [vmem:[#allocation5 + $0x238] sm:$0xff]
    %v131 = vld [vmem:[#allocation5 + $0x240] sm:$0xff]
    %v132 = vld [vmem:[#allocation5 + $0x248] sm:$0xff]
    %v133 = vld [vmem:[#allocation5 + $0x250] sm:$0xff]
    %v134 = vld [vmem:[#allocation5 + $0x258] sm:$0xff]
    %v135 = vld [vmem:[#allocation5 + $0x260] sm:$0xff]
    %v136 = vld [vmem:[#allocation5 + $0x268] sm:$0xff]
    %v137 = vld [vmem:[#allocation5 + $0x270] sm:$0xff]
    %v138 = vld [vmem:[#allocation5 + $0x278] sm:$0xff]
    %v139 = vld [vmem:[#allocation5 + $0x280] sm:$0xff]
    %v140 = vld [vmem:[#allocation5 + $0x288] sm:$0xff]
    %v141 = vld [vmem:[#allocation5 + $0x290] sm:$0xff]
    %v142 = vld [vmem:[#allocation5 + $0x298] sm:$0xff]
    %v143 = vld [vmem:[#allocation5 + $0x2a0] sm:$0xff]
    %v144 = vld [vmem:[#allocation5 + $0x2a8] sm:$0xff]
    %v145 = vld [vmem:[#allocation5 + $0x2b0] sm:$0xff]
    %v146 = vld [vmem:[#allocation5 + $0x2b8] sm:$0xff]
    %v147 = vld [vmem:[#allocation5 + $0x2c0] sm:$0xff]
    %v148 = vld [vmem:[#allocation5 + $0x2c8] sm:$0xff]
    %v149 = vld [vmem:[#allocation5 + $0x2d0] sm:$0xff]
    %v150 = vld [vmem:[#allocation5 + $0x2d8] sm:$0xff]
    %v151 = vld [vmem:[#allocation5 + $0x2e0] sm:$0xff]
    %v152 = vld [vmem:[#allocation5 + $0x2e8] sm:$0xff]
    %v153 = vld [vmem:[#allocation5 + $0x2f0] sm:$0xff]
    %v154 = vld [vmem:[#allocation5 + $0x2f8] sm:$0xff]
    %v155 = vld [vmem:[#allocation5 + $0x300] sm:$0xff]
    %v156 = vld [vmem:[#allocation5 + $0x308] sm:$0xff]
    %v157 = vld [vmem:[#allocation5 + $0x310] sm:$0xff]
    %v158 = vld [vmem:[#allocation5 + $0x318] sm:$0xff]
    %v159 = vld [vmem:[#allocation5 + $0x320] sm:$0xff]
    %v160 = vld [vmem:[#allocation5 + $0x328] sm:$0xff]
    %v161 = vld [vmem:[#allocation5 + $0x330] sm:$0xff]
    %v162 = vld [vmem:[#allocation5 + $0x338] sm:$0xff]
    %v163 = vld [vmem:[#allocation5 + $0x340] sm:$0xff]
    %v164 = vld [vmem:[#allocation5 + $0x348] sm:$0xff]
    %v165 = vld [vmem:[#allocation5 + $0x350] sm:$0xff]
    %v166 = vld [vmem:[#allocation5 + $0x358] sm:$0xff]
    %v167 = vld [vmem:[#allocation5 + $0x360] sm:$0xff]
    %v168 = vld [vmem:[#allocation5 + $0x368] sm:$0xff]
    %v169 = vld [vmem:[#allocation5 + $0x370] sm:$0xff]
    %v170 = vld [vmem:[#allocation5 + $0x378] sm:$0xff]
    %v171 = vld [vmem:[#allocation5 + $0x380] sm:$0xff]
    %v172 = vld [vmem:[#allocation5 + $0x388] sm:$0xff]
    %v173 = vld [vmem:[#allocation5 + $0x390] sm:$0xff]
    %v174 = vld [vmem:[#allocation5 + $0x398] sm:$0xff]
    %v175 = vld [vmem:[#allocation5 + $0x3a0] sm:$0xff]
    %v176 = vld [vmem:[#allocation5 + $0x3a8] sm:$0xff]
    %v177 = vld [vmem:[#allocation5 + $0x3b0] sm:$0xff]
    %v178 = vld [vmem:[#allocation5 + $0x3b8] sm:$0xff]
    %v179 = vld [vmem:[#allocation5 + $0x3c0] sm:$0xff]
    %v180 = vld [vmem:[#allocation5 + $0x3c8] sm:$0xff]
    %v181 = vld [vmem:[#allocation5 + $0x3d0] sm:$0xff]
    %v182 = vld [vmem:[#allocation5 + $0x3d8] sm:$0xff]
    %v183 = vld [vmem:[#allocation5 + $0x3e0] sm:$0xff]
    %v184 = vld [vmem:[#allocation5 + $0x3e8] sm:$0xff]
    %v185 = vld [vmem:[#allocation5 + $0x3f0] sm:$0xff]
    %v186 = vld [vmem:[#allocation5 + $0x3f8] sm:$0xff]
    %v187 = vld [vmem:[%s2] sm:$0x1]
    %v189 = vlaneseq
    %v190 = vshrl.u32 %v189, 7
    %v191 = vsub.s32 0, %v190
    %v192 = vrot.slane %v187, %v191
    %194 = vmatprep.subr.mxu0 0.0
    %195 = vmatpush1.msra.mxu0 %v59
    %196 = vmatprep.subr.mxu0 0.0
    %197 = vmatpush1.msra.mxu0 %v60
    %198 = vmatprep.subr.mxu0 0.0
    %199 = vmatpush1.msra.mxu0 %v61
    %200 = vmatprep.subr.mxu0 0.0
    %201 = vmatpush1.msra.mxu0 %v62
    %202 = vmatprep.subr.mxu0 0.0
    %203 = vmatpush1.msra.mxu0 %v63
    %204 = vmatprep.subr.mxu0 0.0
    %205 = vmatpush1.msra.mxu0 %v64
    %206 = vmatprep.subr.mxu0 0.0
    %207 = vmatpush1.msra.mxu0 %v65
    %208 = vmatprep.subr.mxu0 0.0
    %209 = vmatpush1.msra.mxu0 %v66
    %210 = vmatprep.subr.mxu0 0.0
    %211 = vmatpush1.msra.mxu0 %v67
    %212 = vmatprep.subr.mxu0 0.0
    %213 = vmatpush1.msra.mxu0 %v68
    %214 = vmatprep.subr.mxu0 0.0
    %215 = vmatpush1.msra.mxu0 %v69
    %216 = vmatprep.subr.mxu0 0.0
    %217 = vmatpush1.msra.mxu0 %v70
    %218 = vmatprep.subr.mxu0 0.0
    %219 = vmatpush1.msra.mxu0 %v71
    %220 = vmatprep.subr.mxu0 0.0
    %221 = vmatpush1.msra.mxu0 %v72
    %222 = vmatprep.subr.mxu0 0.0
    %223 = vmatpush1.msra.mxu0 %v73
    %224 = vmatprep.subr.mxu0 0.0
    %225 = vmatpush1.msra.mxu0 %v74
    %226 = vmatprep.subr.mxu0 0.0
    %227 = vmatpush1.msra.mxu0 %v75
    %228 = vmatprep.subr.mxu0 0.0
    %229 = vmatpush1.msra.mxu0 %v76
    %230 = vmatprep.subr.mxu0 0.0
    %231 = vmatpush1.msra.mxu0 %v77
    %232 = vmatprep.subr.mxu0 0.0
    %233 = vmatpush1.msra.mxu0 %v78
    %234 = vmatprep.subr.mxu0 0.0
    %235 = vmatpush1.msra.mxu0 %v79
    %236 = vmatprep.subr.mxu0 0.0
    %237 = vmatpush1.msra.mxu0 %v80
    %238 = vmatprep.subr.mxu0 0.0
    %239 = vmatpush1.msra.mxu0 %v81
    %240 = vmatprep.subr.mxu0 0.0
    %241 = vmatpush1.msra.mxu0 %v82
    %242 = vmatprep.subr.mxu0 0.0
    %243 = vmatpush1.msra.mxu0 %v83
    %244 = vmatprep.subr.mxu0 0.0
    %245 = vmatpush1.msra.mxu0 %v84
    %246 = vmatprep.subr.mxu0 0.0
    %247 = vmatpush1.msra.mxu0 %v85
    %248 = vmatprep.subr.mxu0 0.0
    %249 = vmatpush1.msra.mxu0 %v86
    %250 = vmatprep.subr.mxu0 0.0
    %251 = vmatpush1.msra.mxu0 %v87
    %252 = vmatprep.subr.mxu0 0.0
    %253 = vmatpush1.msra.mxu0 %v88
    %254 = vmatprep.subr.mxu0 0.0
    %255 = vmatpush1.msra.mxu0 %v89
    %256 = vmatprep.subr.mxu0 0.0
    %257 = vmatpush1.msra.mxu0 %v90
    %258 = vmatprep.mubr.f32.mxu0 %v44
    %259 = vmatmul.mubr.f32.gmra.mrb[0].mxu0 %v43
    %v260 = vpop.f32.mrb[0].mxu0
    %v261 = vadd.f32 %v192, %v260
    %v262 = vpop.f32.mrb[0].mxu0
    %263 = vmatprep.mubr.f32.mxu0 %v52
    %264 = vmatmul.mubr.f32.gmra.mrb[0].mxu0 %v51
    %v265 = vpop.f32.mrb[0].mxu0
    %v266 = vadd.f32 %v192, %v265
    %v267 = vpop.f32.mrb[0].mxu0
    %268 = vdwg.mxu0
    %269 = vmatprep.subr.mxu0 0.0
    %270 = vmatpush1.msra.mxu0 %v91
    %271 = vmatprep.subr.mxu0 0.0
    %272 = vmatpush1.msra.mxu0 %v92
    %273 = vmatprep.subr.mxu0 0.0
    %274 = vmatpush1.msra.mxu0 %v93
    %275 = vmatprep.subr.mxu0 0.0
    %276 = vmatpush1.msra.mxu0 %v94
    %277 = vmatprep.subr.mxu0 0.0
    %278 = vmatpush1.msra.mxu0 %v95
    %279 = vmatprep.subr.mxu0 0.0
    %280 = vmatpush1.msra.mxu0 %v96
    %281 = vmatprep.subr.mxu0 0.0
    %282 = vmatpush1.msra.mxu0 %v97
    %283 = vmatprep.subr.mxu0 0.0
    %284 = vmatpush1.msra.mxu0 %v98
    %285 = vmatprep.subr.mxu0 0.0
    %286 = vmatpush1.msra.mxu0 %v99
    %287 = vmatprep.subr.mxu0 0.0
    %288 = vmatpush1.msra.mxu0 %v100
    %289 = vmatprep.subr.mxu0 0.0
    %290 = vmatpush1.msra.mxu0 %v101
    %291 = vmatprep.subr.mxu0 0.0
    %292 = vmatpush1.msra.mxu0 %v102
    %293 = vmatprep.subr.mxu0 0.0
    %294 = vmatpush1.msra.mxu0 %v103
    %295 = vmatprep.subr.mxu0 0.0
    %296 = vmatpush1.msra.mxu0 %v104
    %297 = vmatprep.subr.mxu0 0.0
    %298 = vmatpush1.msra.mxu0 %v105
    %299 = vmatprep.subr.mxu0 0.0
    %300 = vmatpush1.msra.mxu0 %v106
    %301 = vmatprep.subr.mxu0 0.0
    %302 = vmatpush1.msra.mxu0 %v107
    %303 = vmatprep.subr.mxu0 0.0
    %304 = vmatpush1.msra.mxu0 %v108
    %305 = vmatprep.subr.mxu0 0.0
    %306 = vmatpush1.msra.mxu0 %v109
    %307 = vmatprep.subr.mxu0 0.0
    %308 = vmatpush1.msra.mxu0 %v110
    %309 = vmatprep.subr.mxu0 0.0
    %310 = vmatpush1.msra.mxu0 %v111
    %311 = vmatprep.subr.mxu0 0.0
    %312 = vmatpush1.msra.mxu0 %v112
    %313 = vmatprep.subr.mxu0 0.0
    %314 = vmatpush1.msra.mxu0 %v113
    %315 = vmatprep.subr.mxu0 0.0
    %316 = vmatpush1.msra.mxu0 %v114
    %317 = vmatprep.subr.mxu0 0.0
    %318 = vmatpush1.msra.mxu0 %v115
    %319 = vmatprep.subr.mxu0 0.0
    %320 = vmatpush1.msra.mxu0 %v116
    %321 = vmatprep.subr.mxu0 0.0
    %322 = vmatpush1.msra.mxu0 %v117
    %323 = vmatprep.subr.mxu0 0.0
    %324 = vmatpush1.msra.mxu0 %v118
    %325 = vmatprep.subr.mxu0 0.0
    %326 = vmatpush1.msra.mxu0 %v119
    %327 = vmatprep.subr.mxu0 0.0
    %328 = vmatpush1.msra.mxu0 %v120
    %329 = vmatprep.subr.mxu0 0.0
    %330 = vmatpush1.msra.mxu0 %v121
    %331 = vmatprep.subr.mxu0 0.0
    %332 = vmatpush1.msra.mxu0 %v122
    %333 = vmatprep.mubr.f32.mxu0 %v46
    %334 = vmatmul.mubr.f32.gmra.mrb[0].mxu0 %v45
    %v335 = vpop.f32.mrb[0].mxu0
    %v336 = vadd.f32 %v261, %v335
    %v337 = vpop.f32.mrb[0].mxu0
    %338 = vmatprep.mubr.f32.mxu0 %v54
    %339 = vmatmul.mubr.f32.gmra.mrb[0].mxu0 %v53
    %v340 = vpop.f32.mrb[0].mxu0
    %v341 = vadd.f32 %v266, %v340
    %v342 = vpop.f32.mrb[0].mxu0
    %343 = vdwg.mxu0
    %344 = vmatprep.subr.mxu0 0.0
    %345 = vmatpush1.msra.mxu0 %v123
    %346 = vmatprep.subr.mxu0 0.0
    %347 = vmatpush1.msra.mxu0 %v124
    %348 = vmatprep.subr.mxu0 0.0
    %349 = vmatpush1.msra.mxu0 %v125
    %350 = vmatprep.subr.mxu0 0.0
    %351 = vmatpush1.msra.mxu0 %v126
    %352 = vmatprep.subr.mxu0 0.0
    %353 = vmatpush1.msra.mxu0 %v127
    %354 = vmatprep.subr.mxu0 0.0
    %355 = vmatpush1.msra.mxu0 %v128
    %356 = vmatprep.subr.mxu0 0.0
    %357 = vmatpush1.msra.mxu0 %v129
    %358 = vmatprep.subr.mxu0 0.0
    %359 = vmatpush1.msra.mxu0 %v130
    %360 = vmatprep.subr.mxu0 0.0
    %361 = vmatpush1.msra.mxu0 %v131
    %362 = vmatprep.subr.mxu0 0.0
    %363 = vmatpush1.msra.mxu0 %v132
    %364 = vmatprep.subr.mxu0 0.0
    %365 = vmatpush1.msra.mxu0 %v133
    %366 = vmatprep.subr.mxu0 0.0
    %367 = vmatpush1.msra.mxu0 %v134
    %368 = vmatprep.subr.mxu0 0.0
    %369 = vmatpush1.msra.mxu0 %v135
    %370 = vmatprep.subr.mxu0 0.0
    %371 = vmatpush1.msra.mxu0 %v136
    %372 = vmatprep.subr.mxu0 0.0
    %373 = vmatpush1.msra.mxu0 %v137
    %374 = vmatprep.subr.mxu0 0.0
    %375 = vmatpush1.msra.mxu0 %v138
    %376 = vmatprep.subr.mxu0 0.0
    %377 = vmatpush1.msra.mxu0 %v139
    %378 = vmatprep.subr.mxu0 0.0
    %379 = vmatpush1.msra.mxu0 %v140
    %380 = vmatprep.subr.mxu0 0.0
    %381 = vmatpush1.msra.mxu0 %v141
    %382 = vmatprep.subr.mxu0 0.0
    %383 = vmatpush1.msra.mxu0 %v142
    %384 = vmatprep.subr.mxu0 0.0
    %385 = vmatpush1.msra.mxu0 %v143
    %386 = vmatprep.subr.mxu0 0.0
    %387 = vmatpush1.msra.mxu0 %v144
    %388 = vmatprep.subr.mxu0 0.0
    %389 = vmatpush1.msra.mxu0 %v145
    %390 = vmatprep.subr.mxu0 0.0
    %391 = vmatpush1.msra.mxu0 %v146
    %392 = vmatprep.subr.mxu0 0.0
    %393 = vmatpush1.msra.mxu0 %v147
    %394 = vmatprep.subr.mxu0 0.0
    %395 = vmatpush1.msra.mxu0 %v148
    %396 = vmatprep.subr.mxu0 0.0
    %397 = vmatpush1.msra.mxu0 %v149
    %398 = vmatprep.subr.mxu0 0.0
    %399 = vmatpush1.msra.mxu0 %v150
    %400 = vmatprep.subr.mxu0 0.0
    %401 = vmatpush1.msra.mxu0 %v151
    %402 = vmatprep.subr.mxu0 0.0
    %403 = vmatpush1.msra.mxu0 %v152
    %404 = vmatprep.subr.mxu0 0.0
    %405 = vmatpush1.msra.mxu0 %v153
    %406 = vmatprep.subr.mxu0 0.0
    %407 = vmatpush1.msra.mxu0 %v154
    %408 = vmatprep.mubr.f32.mxu0 %v48
    %409 = vmatmul.mubr.f32.gmra.mrb[0].mxu0 %v47
    %v410 = vpop.f32.mrb[0].mxu0
    %v411 = vadd.f32 %v336, %v410
    %v412 = vpop.f32.mrb[0].mxu0
    %413 = vmatprep.mubr.f32.mxu0 %v56
    %414 = vmatmul.mubr.f32.gmra.mrb[0].mxu0 %v55
    %v415 = vpop.f32.mrb[0].mxu0
    %v416 = vadd.f32 %v341, %v415
    %v417 = vpop.f32.mrb[0].mxu0
    %418 = vdwg.mxu0
    %419 = vmatprep.subr.mxu0 0.0
    %420 = vmatpush1.msra.mxu0 %v155
    %421 = vmatprep.subr.mxu0 0.0
    %422 = vmatpush1.msra.mxu0 %v156
    %423 = vmatprep.subr.mxu0 0.0
    %424 = vmatpush1.msra.mxu0 %v157
    %425 = vmatprep.subr.mxu0 0.0
    %426 = vmatpush1.msra.mxu0 %v158
    %427 = vmatprep.subr.mxu0 0.0
    %428 = vmatpush1.msra.mxu0 %v159
    %429 = vmatprep.subr.mxu0 0.0
    %430 = vmatpush1.msra.mxu0 %v160
    %431 = vmatprep.subr.mxu0 0.0
    %432 = vmatpush1.msra.mxu0 %v161
    %433 = vmatprep.subr.mxu0 0.0
    %434 = vmatpush1.msra.mxu0 %v162
    %435 = vmatprep.subr.mxu0 0.0
    %436 = vmatpush1.msra.mxu0 %v163
    %437 = vmatprep.subr.mxu0 0.0
    %438 = vmatpush1.msra.mxu0 %v164
    %439 = vmatprep.subr.mxu0 0.0
    %440 = vmatpush1.msra.mxu0 %v165
    %441 = vmatprep.subr.mxu0 0.0
    %442 = vmatpush1.msra.mxu0 %v166
    %443 = vmatprep.subr.mxu0 0.0
    %444 = vmatpush1.msra.mxu0 %v167
    %445 = vmatprep.subr.mxu0 0.0
    %446 = vmatpush1.msra.mxu0 %v168
    %447 = vmatprep.subr.mxu0 0.0
    %448 = vmatpush1.msra.mxu0 %v169
    %449 = vmatprep.subr.mxu0 0.0
    %450 = vmatpush1.msra.mxu0 %v170
    %451 = vmatprep.subr.mxu0 0.0
    %452 = vmatpush1.msra.mxu0 %v171
    %453 = vmatprep.subr.mxu0 0.0
    %454 = vmatpush1.msra.mxu0 %v172
    %455 = vmatprep.subr.mxu0 0.0
    %456 = vmatpush1.msra.mxu0 %v173
    %457 = vmatprep.subr.mxu0 0.0
    %458 = vmatpush1.msra.mxu0 %v174
    %459 = vmatprep.subr.mxu0 0.0
    %460 = vmatpush1.msra.mxu0 %v175
    %461 = vmatprep.subr.mxu0 0.0
    %462 = vmatpush1.msra.mxu0 %v176
    %463 = vmatprep.subr.mxu0 0.0
    %464 = vmatpush1.msra.mxu0 %v177
    %465 = vmatprep.subr.mxu0 0.0
    %466 = vmatpush1.msra.mxu0 %v178
    %467 = vmatprep.subr.mxu0 0.0
    %468 = vmatpush1.msra.mxu0 %v179
    %469 = vmatprep.subr.mxu0 0.0
    %470 = vmatpush1.msra.mxu0 %v180
    %471 = vmatprep.subr.mxu0 0.0
    %472 = vmatpush1.msra.mxu0 %v181
    %473 = vmatprep.subr.mxu0 0.0
    %474 = vmatpush1.msra.mxu0 %v182
    %475 = vmatprep.subr.mxu0 0.0
    %476 = vmatpush1.msra.mxu0 %v183
    %477 = vmatprep.subr.mxu0 0.0
    %478 = vmatpush1.msra.mxu0 %v184
    %479 = vmatprep.subr.mxu0 0.0
    %480 = vmatpush1.msra.mxu0 %v185
    %481 = vmatprep.subr.mxu0 0.0
    %482 = vmatpush1.msra.mxu0 %v186
    %483 = vmatprep.mubr.f32.mxu0 %v50
    %484 = vmatmul.mubr.f32.gmra.mrb[0].mxu0 %v49
    %v485 = vpop.f32.mrb[0].mxu0
    %v486 = vadd.f32 %v411, %v485
    %v487 = vpop.f32.mrb[0].mxu0
    %488 = vmatprep.mubr.f32.mxu0 %v58
    %489 = vmatmul.mubr.f32.gmra.mrb[0].mxu0 %v57
    %v490 = vpop.f32.mrb[0].mxu0
    %v491 = vadd.f32 %v416, %v490
    %v492 = vpop.f32.mrb[0].mxu0
    %493 = vdwg.mxu0
    %494 = vst [vmem:[#allocation7] sm:$0xff] %v486
    %495 = vst [vmem:[#allocation7 + $0x8] sm:$0xff] %v491
    // Predicated region
    $region22: #{tpu_custom_call.1} parent=1 // pred_check
      _
    $region23: #{tpu_custom_call.1} parent=1 // pred_check_branch
      %497 = sbr.rel (0) target = $region25
    $region24: #{tpu_custom_call.1} parent=1 // pred_region
      %s499 = ssub.s32 256, 256
      %500 = vsyncadd [#allocation4], %s499
      %s501 = sshll.u32 [#allocation7], 4
      %s502 = int_to_ptr.vmem [resolvable:$true] %s501
      %507 = dma.vmem_to_hbm [thread:$0]  %s502, 256, %s3, [#allocation4], 128, 128, 8
    $region25: #{tpu_custom_call.1} parent=1 // pred_fallthru
      _
    // Predicated region
    $region26: #{tpu_custom_call.1} parent=1 // pred_check
      _
    $region27: #{tpu_custom_call.1} parent=1 // pred_check_branch
      %509 = sbr.rel (0) target = $region29
    $region28: #{tpu_custom_call.1} parent=1 // pred_region
      %510 = dma.done [#allocation4], 256
    $region29: #{tpu_custom_call.1} parent=1 // pred_fallthru
      _
    %511 = vsyncpa [#allocation3], 1
    %512 = vsyncpa [#allocation6], 1
    %513 = vsyncpa [#allocation4], 1

</llo_original>
